<compile_context>
chip_gen: v7x
topology: tpu7x:2x2x1
jax: 0.10.0
libtpu: 0.0.40
codegen_flags: <defaults>
</compile_context>

<pallas_src>
from functools import partial

import jax
import jax.numpy as jnp
from jax.experimental import pallas as pl
from jax.experimental.pallas import tpu as pltpu

_LANE = 128
_SUBLANE = 8
_TARGET_BLOCK_BYTES = 4 * 1024 * 1024   # ~4 MiB per activation block
_MIN_SPLIT_BLOCK_BYTES = 256 * 1024     # don't force-split below this
_MIN_GRID_STEPS = 4                     # >= 2 x v7x TensorCores
_VMEM_LIMIT_BYTES = 48 << 20            # fits v5e/v6e/v7x physical VMEM


def _choose_blocks(m, l, elem_bytes, target_bytes=_TARGET_BLOCK_BYTES):
    """Pick (row_block, lane_block) for an (m, l) slab.

    Lane block is the full row whenever a sublane-high slab fits the target
    (contiguous DMA, no masked lane tail); otherwise a multiple of 128.
    Row block is either the full extent or a dtype-aware sublane multiple,
    then capped so mid/large inputs yield >= _MIN_GRID_STEPS grid steps.
    """
    # Sub-32-bit dtypes pack along sublanes: 8 (f32), 16 (bf16), 32 (int8).
    sub = max(_SUBLANE, (_SUBLANE * 4) // elem_bytes)

    # Lane block: prefer the full row.
    if sub * l * elem_bytes <= target_bytes or l <= _LANE:
        l_blk = l
    else:
        l_blk = max(_LANE, (target_bytes // (sub * elem_bytes)) // _LANE * _LANE)

    # Row block: fill the target.
    r = max(1, target_bytes // (l_blk * elem_bytes))
    if r >= m:
        r_blk = m  # full extent: always a legal block dim
    else:
        r_blk = max(sub, (r // sub) * sub)

    # Guarantee enough grid steps for megacore sharding / pipeline overlap,
    # but never shrink tiny blocks (per-step overhead would dominate).
    def _steps(rb):
        return pl.cdiv(m, rb) * pl.cdiv(l, l_blk)

    while (_steps(r_blk) < _MIN_GRID_STEPS
           and (r_blk // 2) * l_blk * elem_bytes >= _MIN_SPLIT_BLOCK_BYTES):
        half = (r_blk // 2 // sub) * sub
        if half < sub:
            break
        r_blk = half

    return int(r_blk), int(l_blk)


def _frozen_bn_kernel(x_ref, affine_ref, o_ref):
    # x_ref:      (r_blk, l_blk) activation tile
    # affine_ref: (r_blk, 2) per-row [scale, shift] (f32)
    x = x_ref[...].astype(jnp.float32)
    a = affine_ref[...]
    scale = a[:, 0:1]
    shift = a[:, 1:2]
    o_ref[...] = (x * scale + shift).astype(o_ref.dtype)


@partial(jax.jit, static_argnames=("eps",))
def frozen_batch_norm_2d(x, weight, bias, running_mean, running_var, *,
                         eps=1e-5):
    """x: (N, C, H, W); buffers: (C,). Returns (N, C, H, W) in x.dtype."""
    n, c, h, w = x.shape
    l = h * w
    m = n * c

    # Fold the frozen buffers into a single scale/shift (f32, C elements).
    scale = weight.astype(jnp.float32) * jax.lax.rsqrt(
        running_var.astype(jnp.float32) + eps)
    shift = bias.astype(jnp.float32) - running_mean.astype(jnp.float32) * scale

    # Row r of the (N*C, H*W) view has channel r % C; tile over the batch and
    # pack [scale, shift] into one (m, 2) array (single small DMA stream).
    affine = jnp.stack([jnp.tile(scale, n), jnp.tile(shift, n)], axis=1)

    # Pure contiguous reshape of NCHW -> (N*C, H*W): no transpose, no copy.
    x2d = x.reshape(m, l)

    r_blk, l_blk = _choose_blocks(m, l, x.dtype.itemsize)
    grid = (pl.cdiv(m, r_blk), pl.cdiv(l, l_blk))

    out2d = pl.pallas_call(
        _frozen_bn_kernel,
        out_shape=jax.ShapeDtypeStruct((m, l), x.dtype),
        grid_spec=pltpu.PrefetchScalarGridSpec(
            num_scalar_prefetch=0,
            grid=grid,
            in_specs=[
                pl.BlockSpec((r_blk, l_blk), lambda i, j: (i, j)),
                pl.BlockSpec((r_blk, 2), lambda i, j: (i, 0)),
            ],
            out_specs=pl.BlockSpec((r_blk, l_blk), lambda i, j: (i, j)),
        ),
        compiler_params=pltpu.CompilerParams(
            dimension_semantics=("parallel", "parallel"),
            vmem_limit_bytes=_VMEM_LIMIT_BYTES),
    )(x2d, affine)

    return out2d.reshape(n, c, h, w)


def _reference(x, weight, bias, running_mean, running_var, eps=1e-5):
    w = weight.reshape(1, -1, 1, 1)
    b = bias.reshape(1, -1, 1, 1)
    rv = running_var.reshape(1, -1, 1, 1)
    rm = running_mean.reshape(1, -1, 1, 1)
    scale = w * jax.lax.rsqrt(rv + eps)
    return x * scale + (b - rm * scale)


def _run_case(key, n, c, h, w, dtype=jnp.float32):
    kx, kw, kb, km, kv = jax.random.split(key, 5)
    x = jax.random.normal(kx, (n, c, h, w), dtype=jnp.float32).astype(dtype)
    weight = 1.0 + 0.1 * jax.random.normal(kw, (c,), dtype=jnp.float32)
    bias = 0.1 * jax.random.normal(kb, (c,), dtype=jnp.float32)
    running_mean = 0.2 * jax.random.normal(km, (c,), dtype=jnp.float32)
    running_var = jnp.abs(
        1.0 + 0.1 * jax.random.normal(kv, (c,), dtype=jnp.float32))

    out = frozen_batch_norm_2d(x, weight, bias, running_mean, running_var)
    out = jax.block_until_ready(out)
    ref = _reference(x.astype(jnp.float32), weight, bias,
                     running_mean, running_var)
    assert out.shape == (n, c, h, w)
    tol = 1e-5 if dtype == jnp.float32 else 2e-2
    assert jnp.allclose(out.astype(jnp.float32), ref, atol=tol, rtol=tol), (
        f"mismatch vs reference for shape {(n, c, h, w)} dtype {dtype}")
    return x


if __name__ == "__main__":
    key = jax.random.PRNGKey(0)
    k1, k2, k3 = jax.random.split(key, 3)

    # Primary small case consistent with the module spec.
    x = _run_case(k1, 2, 4, 16, 16)

    # Secondary case exercising multi-block rows + ragged last row block.
    _run_case(k2, 2, 256, 56, 56)

    # bf16 case exercising the dtype-aware sublane rounding path.
    _run_case(k3, 2, 64, 28, 28, dtype=jnp.bfloat16)

    # Sanity: default (identity) buffers reproduce the input (up to the
    # ~5e-6 relative error introduced by rsqrt(1 + eps)).
    C = 4
    ident = frozen_batch_norm_2d(x, jnp.ones((C,)), jnp.zeros((C,)),
                                 jnp.zeros((C,)), jnp.ones((C,)))
    assert jnp.allclose(jax.block_until_ready(ident), x,
                        atol=1e-6, rtol=1e-5)

    print("KERNEL_OK")
</pallas_src>

<mosaic_0001>
module attributes {stable_mosaic.version = 11 : i64} {
  func.func @_frozen_bn_kernel(%arg0: i32, %arg1: i32, %arg2: memref<8x256xf32, #tpu.memory_space<vmem>>, %arg3: memref<8x2xf32, #tpu.memory_space<vmem>>, %arg4: memref<8x256xf32, #tpu.memory_space<vmem>>) attributes {dimension_semantics = [#tpu.dimension_semantics<parallel>, #tpu.dimension_semantics<parallel>], iteration_bounds = array<i64: 1, 1>, scalar_prefetch = 0 : i64, scratch_operands = 0 : i64, tpu.core_type = #tpu.core_type<tc>, window_params = [{transform_indices = @transform_0, window_bounds = array<i64: 8, 256>}, {transform_indices = @transform_1, window_bounds = array<i64: 8, 2>}, {transform_indices = @transform_2, window_bounds = array<i64: 8, 256>}]} {
    %c0 = arith.constant 0 : index
    %c0_0 = arith.constant 0 : index
    %0 = vector.load %arg2[%c0, %c0_0] : memref<8x256xf32, #tpu.memory_space<vmem>>, vector<8x256xf32>
    %c0_1 = arith.constant 0 : index
    %c0_2 = arith.constant 0 : index
    %1 = vector.load %arg3[%c0_1, %c0_2] : memref<8x2xf32, #tpu.memory_space<vmem>>, vector<8x2xf32>
    %2 = vector.extract_strided_slice %1 {offsets = [0, 0], sizes = [8, 1], strides = [1, 1]} : vector<8x2xf32> to vector<8x1xf32>
    %3 = vector.extract_strided_slice %1 {offsets = [0, 1], sizes = [8, 1], strides = [1, 1]} : vector<8x2xf32> to vector<8x1xf32>
    %4 = vector.broadcast %2 : vector<8x1xf32> to vector<8x256xf32>
    %5 = arith.mulf %0, %4 : vector<8x256xf32>
    %6 = vector.broadcast %3 : vector<8x1xf32> to vector<8x256xf32>
    %7 = arith.addf %5, %6 : vector<8x256xf32>
    %c0_3 = arith.constant 0 : index
    %c0_4 = arith.constant 0 : index
    %8 = vector.load %arg4[%c0_3, %c0_4] : memref<8x256xf32, #tpu.memory_space<vmem>>, vector<8x256xf32>
    tpu.vector_store %arg4[%c0_3, %c0_4], %7 {strides = array<i32>} : memref<8x256xf32, #tpu.memory_space<vmem>>, vector<8x256xf32>,
    return
  }
  func.func @transform_0(%arg0: i32, %arg1: i32) -> (i32, i32) {
    %c0_i32 = arith.constant 0 : i32
    return %arg0, %arg1 : i32, i32
  }
  func.func @transform_1(%arg0: i32, %arg1: i32) -> (i32, i32) {
    %c0_i32 = arith.constant 0 : i32
    %c0_i32_0 = arith.constant 0 : i32
    return %arg0, %c0_i32 : i32, i32
  }
  func.func @transform_2(%arg0: i32, %arg1: i32) -> (i32, i32) {
    %c0_i32 = arith.constant 0 : i32
    return %arg0, %arg1 : i32, i32
  }
}

</mosaic_0001>

<llo_original>
// kernel: tile.17
$region0: #{tile.17}
  #allocation0 [shape = 's32[1]{0}', space=sflag, size = 0x4, scoped, tag = 'scoped memory for tile.17']
  %s0 = inlined_call_operand.vmem [shape: f32[4], index: 0, kind: input, shape index: {}]
  %s1 = inlined_call_operand.vmem [shape: f32[2,4], index: 1, kind: output, shape index: {}]
  // Predicated region
  $region2: #{tile.17} parent=0 // pred_check
    _
  $region3: #{tile.17} parent=0 // pred_check_branch
    %3 = sbr.rel (0) target = $region5
  $region4: #{tile.17} parent=0 // pred_region
    _
  $region5: #{tile.17} parent=0 // pred_fallthru
    _
  %v4 = vld [vmem:[%s0] ss:$0 sm:$0xff]
  %5 = vst [vmem:[%s1] sm:$0x3] %v4

// kernel: tile.19
$region0: #{tile.19}
  %s0 = inlined_call_operand.vmem [shape: f32[2,4], index: 0, kind: input, shape index: {}]
  %s1 = inlined_call_operand.vmem [shape: f32[8,1], index: 1, kind: output, shape index: {}]
  $region1: #{tile.19} parent=0
    #allocation0 [shape = 'u8[4096]{0}', space=vmem, size = 0x1000, scoped, tag = 'scoped mem for output reshape']
    #allocation1 [shape = 'u8[4096]{0}', space=vmem, size = 0x1000, scoped, tag = 'scoped mem for input reshape']
    %s3 = sshllo.u32 0, 2
    %v4 = vld [vmem:[%s0] sm:%s3]
    %5 = vst [vmem:[#allocation1] sm:%s3] %v4
    %v6 = vld [vmem:[#allocation1] sm:$0x1]
    %vm7 = vcmask 31744
    %8 = vst.msk [vmem:[#allocation0] sm:$0x1] %vm7, %v6
    %s9 = scalar_lea.vmem [#allocation1], 1
    %v10 = vld [vmem:[%s9] sm:$0x1]
    %11 = vrot.lane.b32.xlu0 %v10, 4
    %v12 = vpop.permute.xlu0 %11
    %vm13 = vcmask 64544
    %14 = vst.msk [vmem:[#allocation0] sm:$0x1] %vm13, %v12
    %s16 = sshllo.u32 0, 1
    %v18 = vld [vmem:[#allocation0] sm:%s16]
    %s19 = sshllo.u32 0, 1
    %20 = vst [vmem:[%s1] sm:%s19] %v18

// kernel: frozen_batch_norm_2d.1
$region0: #{frozen_batch_norm_2d.1}
  #allocation0 [shape = 'u32[]', space=smem, size = 0x4, offset = 0x4, fixed_abs, tag = 'smem constant byte address 0x4 - core index']
  #allocation1 [shape = 'u32[144,128]{1,0:T(1,128)}', space=vmem, size = 0x12000, scoped, tag = 'internal scratch']
  %s0 = inlined_call_operand.vmem [shape: f32[8,256], index: 0, kind: input, shape index: {}]
  %s1 = inlined_call_operand.vmem [shape: f32[8,2], index: 1, kind: input, shape index: {}]
  %s2 = inlined_call_operand.vmem [shape: f32[8,256], index: 2, kind: output, shape index: {}]
  %s3 = sld [smem:[#allocation0]]
  $region18: #{frozen_batch_norm_2d.1} parent=0
    _
  %s5 = ssub.s32 1, %s3
  %s6 = scalar_select 0, %s5, %s3
  // Predicated region
  $region2: #{frozen_batch_norm_2d.1} parent=0 // pred_check
    _
  $region3: #{frozen_batch_norm_2d.1} parent=0 // pred_check_branch
    %8 = sbr.rel (0) target = $region5
  $region4: #{frozen_batch_norm_2d.1} parent=0 // pred_region
    _
  $region5: #{frozen_batch_norm_2d.1} parent=0 // pred_fallthru
    _
  // Predicated region
  $region6: #{frozen_batch_norm_2d.1} parent=0 // pred_check
    _
  $region7: #{frozen_batch_norm_2d.1} parent=0 // pred_check_branch
    %10 = sbr.rel (0) target = $region9
  $region8: #{frozen_batch_norm_2d.1} parent=0 // pred_region
    _
  $region9: #{frozen_batch_norm_2d.1} parent=0 // pred_fallthru
    _
  %v11 = vld [vmem:[%s0] sm:$0xff]
  %v12 = vld [vmem:[%s0 + $0x8] sm:$0xff]
  %v13 = vld [vmem:[%s1] sm:$0xff]
  %15 = vset.pattern.permute.xlu0 0
  %16 = vperm.xlu0 %15, %v13
  %v17 = vpop.permute.xlu0 %16
  %v19 = vmul.f32 %v11, %v17
  %v20 = vmul.f32 %v12, %v17
  %21 = vset.pattern.permute.xlu0 1
  %22 = vperm.xlu0 %21, %v13
  %v23 = vpop.permute.xlu0 %22
  %v25 = vadd.f32 %v19, %v23
  %v26 = vadd.f32 %v20, %v23
  %27 = vst [vmem:[%s2] sm:$0xff] %v25
  %28 = vst [vmem:[%s2 + $0x8] sm:$0xff] %v26
  // Predicated region
  $region10: #{frozen_batch_norm_2d.1} parent=0 // pred_check
    _
  $region11: #{frozen_batch_norm_2d.1} parent=0 // pred_check_branch
    %30 = sbr.rel (0) target = $region13
  $region12: #{frozen_batch_norm_2d.1} parent=0 // pred_region
    _
  $region13: #{frozen_batch_norm_2d.1} parent=0 // pred_fallthru
    _
  // Predicated region
  $region14: #{frozen_batch_norm_2d.1} parent=0 // pred_check
    _
  $region15: #{frozen_batch_norm_2d.1} parent=0 // pred_check_branch
    %32 = sbr.rel (0) target = $region17
  $region16: #{frozen_batch_norm_2d.1} parent=0 // pred_region
    _
  $region17: #{frozen_batch_norm_2d.1} parent=0 // pred_fallthru
    _

</llo_original>
